<compile_context>
chip_gen: v7x
topology: tpu7x:2x2x1
jax: 0.10.0
libtpu: 0.0.40
codegen_flags: <defaults>
</compile_context>

<pallas_src>
import functools

import jax
import jax.numpy as jnp
from jax import lax
from jax.experimental import pallas as pl
from jax.experimental.pallas import tpu as pltpu


def _stats_kernel(x_ref, w_ref, b_ref, scale_ref, shift_ref,
                  sum_ref, sq_ref, *, eps, inv_count):
    """Phase 1: lane-wide sum / sum-of-squares accumulation; finalize folds the
    batch stats and affine params into per-channel (scale, shift)."""
    mi = pl.program_id(2)
    li = pl.program_id(3)

    @pl.when((mi == 0) & (li == 0))
    def _init():
        sum_ref[...] = jnp.zeros_like(sum_ref)
        sq_ref[...] = jnp.zeros_like(sq_ref)

    x = x_ref[...].astype(jnp.float32)           # (M_T, C_T, LANE_T)
    sum_ref[...] += jnp.sum(x, axis=0)           # (C_T, LANE_T): VPU adds only
    sq_ref[...] += jnp.sum(x * x, axis=0)

    @pl.when((mi == pl.num_programs(2) - 1) & (li == pl.num_programs(3) - 1))
    def _finalize():
        # Single cross-lane (XLU) reduce per (group, channel-tile).
        total = jnp.sum(sum_ref[...], axis=-1, keepdims=True)       # (C_T, 1)
        total_sq = jnp.sum(sq_ref[...], axis=-1, keepdims=True)
        mean = total * inv_count
        var = jnp.maximum(total_sq * inv_count - mean * mean, 0.0)
        scale = lax.rsqrt(var + eps) * w_ref[...]                    # (C_T, 1)
        scale_ref[...] = scale
        shift_ref[...] = b_ref[...] - mean * scale


def _normalize_kernel(x_ref, scale_ref, shift_ref, o_ref, *, compute_dtype):
    """Phase 2: y = x * scale + shift (affine folded into scale/shift)."""
    scale = scale_ref[...].astype(compute_dtype)[None, :, :]   # (1, C_T, 1)
    shift = shift_ref[...].astype(compute_dtype)[None, :, :]
    y = x_ref[...].astype(compute_dtype) * scale + shift
    o_ref[...] = y.astype(o_ref.dtype)


def _divisors(n):
    return [d for d in range(1, n + 1) if n % d == 0]


def _vmem_budgets():
    """Generation-aware (block_budget, vmem_limit) in bytes."""
    try:
        vmem_cap = int(pltpu.get_tpu_info().vmem_capacity_bytes)
    except Exception:   # query unavailable: assume the smallest (v7x, 64 MiB)
        vmem_cap = 64 * 1024 * 1024
    vmem_limit = (vmem_cap * 3) // 4                 # 96 MiB v5e/v6e, 48 MiB v7x
    block_budget = max(512 * 1024, vmem_limit // 12)  # ~8 MiB / ~4 MiB blocks
    return block_budget, vmem_limit


def _plan_tiles(mb, ratio, c, hw_p, itemsize, block_budget):
    """Pick (M_TILE, C_TILE, LANE_T): wide lanes first, then fold batch rows,
    then widen the channel tile, all under the per-block VMEM budget."""
    # Channel-tile candidates (descending): multiples of 8 dividing c, else full c.
    if c > 8 and c % 8 == 0:
        c_cands = sorted((d for d in _divisors(c) if d % 8 == 0), reverse=True)
    else:
        c_cands = [c]
    c_min = c_cands[-1]

    # Lane-tile candidates (descending): multiples of 128 dividing hw_p.
    lane_cands = sorted((128 * d for d in _divisors(hw_p // 128)), reverse=True)

    # 1) Widest lane tile that fits with the narrowest channel tile, one row.
    lane_t = next((lt for lt in lane_cands
                   if c_min * lt * itemsize <= block_budget), lane_cands[-1])
    # 2) Fold as many batch rows per block as the budget allows.
    m_t = next((mt for mt in sorted(_divisors(mb), reverse=True)
                if mt * c_min * lane_t * itemsize <= block_budget), 1)
    # 3) Widest channel tile that still fits.
    c_t = next((ct for ct in c_cands
                if m_t * ct * lane_t * itemsize <= block_budget), c_min)
    # Keep >= 2-way (g x c-tile) parallel work for multi-TensorCore chips.
    if ratio * (c // c_t) < 2:
        for ct in c_cands:
            if ct < c_t and m_t * ct * lane_t * itemsize <= block_budget:
                c_t = ct
                break
    return m_t, c_t, lane_t


def ghost_bn2d_forward(x, weight, bias, *, ratio=4, eps=1e-5, donate_x=False):
    """GhostBN2D forward (training-mode path). x is NCHW."""
    n, c, h, w = x.shape
    if n % ratio != 0:
        raise RuntimeError("batch size must be divisible by virtual2actual ratio")
    mb = n // ratio
    hw = h * w
    itemsize = jnp.dtype(x.dtype).itemsize

    block_budget, vmem_limit = _vmem_budgets()

    # Pad HW up to a multiple of 128 so lane tiles stay 128-aligned; the zero
    # padding does not perturb sum / sum-of-squares and is sliced off at the end.
    hw_p = ((hw + 127) // 128) * 128
    x3 = x.reshape(n, c, hw)
    if hw_p != hw:
        x3 = jnp.pad(x3, ((0, 0), (0, 0), (0, hw_p - hw)))
    # Free relayout: row n = m*ratio + g -> (m, g, c, hw); the proxy-group
    # gather is expressed via the index_map below.
    x4 = x3.reshape(mb, ratio, c, hw_p)

    m_t, c_t, lane_t = _plan_tiles(mb, ratio, c, hw_p, itemsize, block_budget)
    num_m = mb // m_t
    num_ct = c // c_t
    num_l = hw_p // lane_t
    inv_count = 1.0 / float(mb * hw)   # real element count (excludes padding)

    w2 = weight.astype(jnp.float32).reshape(c, 1)
    b2 = bias.astype(jnp.float32).reshape(c, 1)

    grid = (ratio, num_ct, num_m, num_l)
    x_spec = pl.BlockSpec((m_t, pl.Squeezed(), c_t, lane_t),
                          lambda g, ci, mi, li: (mi, g, ci, li))
    param_spec = pl.BlockSpec((c_t, 1), lambda g, ci, mi, li: (ci, 0))
    stat_spec = pl.BlockSpec((pl.Squeezed(), c_t, 1),
                             lambda g, ci, mi, li: (g, ci, 0))

    elems = n * c * hw_p
    cost1 = pl.CostEstimate(flops=3 * elems, transcendentals=ratio * c,
                            bytes_accessed=elems * itemsize + 8 * c * (1 + ratio))
    cost2 = pl.CostEstimate(flops=2 * elems, transcendentals=0,
                            bytes_accessed=2 * elems * itemsize + 8 * ratio * c)

    # Phase 1: per proxy-channel batch stats -> (scale, shift), shape (r, C, 1).
    scale, shift = pl.pallas_call(
        functools.partial(_stats_kernel, eps=float(eps), inv_count=inv_count),
        out_shape=(jax.ShapeDtypeStruct((ratio, c, 1), jnp.float32),
                   jax.ShapeDtypeStruct((ratio, c, 1), jnp.float32)),
        grid=grid,
        in_specs=[x_spec, param_spec, param_spec],
        out_specs=(stat_spec, stat_spec),
        scratch_shapes=[pltpu.VMEM((c_t, lane_t), jnp.float32),
                        pltpu.VMEM((c_t, lane_t), jnp.float32)],
        compiler_params=pltpu.CompilerParams(
            dimension_semantics=("parallel", "parallel", "arbitrary", "arbitrary"),
            vmem_limit_bytes=vmem_limit),
        cost_estimate=cost1,
    )(x4, w2, b2)

    # Phase 2: streaming normalize, y = x * scale + shift.
    compute_dtype = x.dtype if x.dtype == jnp.bfloat16 else jnp.float32
    out4 = pl.pallas_call(
        functools.partial(_normalize_kernel, compute_dtype=compute_dtype),
        out_shape=jax.ShapeDtypeStruct((mb, ratio, c, hw_p), x.dtype),
        grid=grid,
        in_specs=[x_spec, stat_spec, stat_spec],
        out_specs=x_spec,
        compiler_params=pltpu.CompilerParams(
            dimension_semantics=("parallel", "parallel", "parallel", "parallel"),
            vmem_limit_bytes=vmem_limit),
        cost_estimate=cost2,
        input_output_aliases={0: 0} if donate_x else {},
    )(x4, scale, shift)

    out3 = out4.reshape(n, c, hw_p)
    if hw_p != hw:
        out3 = out3[..., :hw]
    return out3.reshape(n, c, h, w)


def ghost_bn2d_reference(x, weight, bias, *, ratio=4, eps=1e-5):
    """Pure-JAX reference mirroring the PyTorch proxy BatchNorm2d (training)."""
    n, c, h, w = x.shape
    m = n // ratio
    xr = x.reshape(m, ratio * c, h, w).astype(jnp.float32)
    mean = xr.mean(axis=(0, 2, 3), keepdims=True)
    var = ((xr - mean) ** 2).mean(axis=(0, 2, 3), keepdims=True)
    wt = jnp.tile(weight.astype(jnp.float32), ratio)[None, :, None, None]
    bt = jnp.tile(bias.astype(jnp.float32), ratio)[None, :, None, None]
    y = (xr - mean) / jnp.sqrt(var + eps) * wt + bt
    return y.reshape(n, c, h, w).astype(x.dtype)


if __name__ == "__main__":
    RATIO = 4
    N, C, H, W = 8, 4, 16, 16  # N must be divisible by RATIO

    key = jax.random.PRNGKey(0)
    kx, kw, kb = jax.random.split(key, 3)
    x = jax.random.normal(kx, (N, C, H, W), dtype=jnp.float32)
    # Module init is ones/zeros; use non-trivial affine params to exercise
    # the scale/shift path.
    weight = 1.0 + 0.1 * jax.random.normal(kw, (C,), dtype=jnp.float32)
    bias = 0.1 * jax.random.normal(kb, (C,), dtype=jnp.float32)

    out = ghost_bn2d_forward(x, weight, bias, ratio=RATIO)
    out = jax.block_until_ready(out)

    ref = ghost_bn2d_reference(x, weight, bias, ratio=RATIO)
    assert out.shape == (N, C, H, W)
    assert jnp.allclose(out, ref, rtol=1e-4, atol=1e-4), "mismatch vs reference"

    print("KERNEL_OK")
</pallas_src>

<mosaic_0001>
module attributes {stable_mosaic.version = 11 : i64} {
  func.func @_stats_kernel(%arg0: i32, %arg1: i32, %arg2: i32, %arg3: i32, %arg4: memref<2x1x4x256xf32, #tpu.memory_space<vmem>>, %arg5: memref<4x1xf32, #tpu.memory_space<vmem>>, %arg6: memref<4x1xf32, #tpu.memory_space<vmem>>, %arg7: memref<1x4x1xf32, #tpu.memory_space<vmem>>, %arg8: memref<1x4x1xf32, #tpu.memory_space<vmem>>, %arg9: memref<4x256xf32, #tpu.memory_space<vmem>>, %arg10: memref<4x256xf32, #tpu.memory_space<vmem>>) attributes {dimension_semantics = [#tpu.dimension_semantics<parallel>, #tpu.dimension_semantics<parallel>, #tpu.dimension_semantics<arbitrary>, #tpu.dimension_semantics<arbitrary>], iteration_bounds = array<i64: 4, 1, 1, 1>, scalar_prefetch = 0 : i64, scratch_operands = 2 : i64, tpu.core_type = #tpu.core_type<tc>, window_params = [{transform_indices = @transform_0, window_bounds = array<i64: 2, 1, 4, 256>}, {transform_indices = @transform_1, window_bounds = array<i64: 4, 1>}, {transform_indices = @transform_2, window_bounds = array<i64: 4, 1>}, {transform_indices = @transform_3, window_bounds = array<i64: 1, 4, 1>}, {transform_indices = @transform_4, window_bounds = array<i64: 1, 4, 1>}]} {
    %c0_i32 = arith.constant 0 : i32
    %0 = arith.cmpi eq, %arg2, %c0_i32 : i32
    %c0_i32_0 = arith.constant 0 : i32
    %1 = arith.cmpi eq, %arg3, %c0_i32_0 : i32
    %2 = arith.andi %0, %1 : i1
    %3 = arith.extui %2 : i1 to i32
    %c0_i32_1 = arith.constant 0 : i32
    %4 = arith.cmpi ne, %3, %c0_i32_1 : i32
    scf.if %4 {
      %cst_17 = arith.constant 0.000000e+00 : f32
      %21 = vector.broadcast %cst_17 : f32 to vector<4x256xf32>
      %c0_18 = arith.constant 0 : index
      %c0_19 = arith.constant 0 : index
      %22 = vector.load %arg9[%c0_18, %c0_19] : memref<4x256xf32, #tpu.memory_space<vmem>>, vector<4x256xf32>
      tpu.vector_store %arg9[%c0_18, %c0_19], %21 {strides = array<i32>} : memref<4x256xf32, #tpu.memory_space<vmem>>, vector<4x256xf32>,
      %cst_20 = arith.constant 0.000000e+00 : f32
      %23 = vector.broadcast %cst_20 : f32 to vector<4x256xf32>
      %c0_21 = arith.constant 0 : index
      %c0_22 = arith.constant 0 : index
      %24 = vector.load %arg10[%c0_21, %c0_22] : memref<4x256xf32, #tpu.memory_space<vmem>>, vector<4x256xf32>
      tpu.vector_store %arg10[%c0_21, %c0_22], %23 {strides = array<i32>} : memref<4x256xf32, #tpu.memory_space<vmem>>, vector<4x256xf32>,
    } else {
    }
    %c0 = arith.constant 0 : index
    %c0_2 = arith.constant 0 : index
    %c0_3 = arith.constant 0 : index
    %c0_4 = arith.constant 0 : index
    %5 = vector.load %arg4[%c0, %c0_2, %c0_3, %c0_4] : memref<2x1x4x256xf32, #tpu.memory_space<vmem>>, vector<2x1x4x256xf32>
    %6 = vector.shape_cast %5 : vector<2x1x4x256xf32> to vector<2x4x256xf32>
    %c0_5 = arith.constant 0 : index
    %c0_6 = arith.constant 0 : index
    %7 = vector.load %arg9[%c0_5, %c0_6] : memref<4x256xf32, #tpu.memory_space<vmem>>, vector<4x256xf32>
    %cst = arith.constant dense<0.000000e+00> : vector<4x256xf32>
    %8 = vector.multi_reduction <add>, %6, %cst [0] : vector<2x4x256xf32> to vector<4x256xf32>
    %9 = arith.addf %7, %8 : vector<4x256xf32>
    %c0_7 = arith.constant 0 : index
    %c0_8 = arith.constant 0 : index
    %10 = vector.load %arg9[%c0_7, %c0_8] : memref<4x256xf32, #tpu.memory_space<vmem>>, vector<4x256xf32>
    tpu.vector_store %arg9[%c0_7, %c0_8], %9 {strides = array<i32>} : memref<4x256xf32, #tpu.memory_space<vmem>>, vector<4x256xf32>,
    %c0_9 = arith.constant 0 : index
    %c0_10 = arith.constant 0 : index
    %11 = vector.load %arg10[%c0_9, %c0_10] : memref<4x256xf32, #tpu.memory_space<vmem>>, vector<4x256xf32>
    %12 = arith.mulf %6, %6 : vector<2x4x256xf32>
    %cst_11 = arith.constant dense<0.000000e+00> : vector<4x256xf32>
    %13 = vector.multi_reduction <add>, %12, %cst_11 [0] : vector<2x4x256xf32> to vector<4x256xf32>
    %14 = arith.addf %11, %13 : vector<4x256xf32>
    %c0_12 = arith.constant 0 : index
    %c0_13 = arith.constant 0 : index
    %15 = vector.load %arg10[%c0_12, %c0_13] : memref<4x256xf32, #tpu.memory_space<vmem>>, vector<4x256xf32>
    tpu.vector_store %arg10[%c0_12, %c0_13], %14 {strides = array<i32>} : memref<4x256xf32, #tpu.memory_space<vmem>>, vector<4x256xf32>,
    %c0_i32_14 = arith.constant 0 : i32
    %16 = arith.cmpi eq, %arg2, %c0_i32_14 : i32
    %c0_i32_15 = arith.constant 0 : i32
    %17 = arith.cmpi eq, %arg3, %c0_i32_15 : i32
    %18 = arith.andi %16, %17 : i1
    %19 = arith.extui %18 : i1 to i32
    %c0_i32_16 = arith.constant 0 : i32
    %20 = arith.cmpi ne, %19, %c0_i32_16 : i32
    scf.if %20 {
      %c0_17 = arith.constant 0 : index
      %c0_18 = arith.constant 0 : index
      %21 = vector.load %arg9[%c0_17, %c0_18] : memref<4x256xf32, #tpu.memory_space<vmem>>, vector<4x256xf32>
      %cst_19 = arith.constant dense<0.000000e+00> : vector<4xf32>
      %22 = vector.multi_reduction <add>, %21, %cst_19 [1] : vector<4x256xf32> to vector<4xf32>
      %23 = vector.shape_cast %22 : vector<4xf32> to vector<4x1xf32>
      %c0_20 = arith.constant 0 : index
      %c0_21 = arith.constant 0 : index
      %24 = vector.load %arg10[%c0_20, %c0_21] : memref<4x256xf32, #tpu.memory_space<vmem>>, vector<4x256xf32>
      %cst_22 = arith.constant dense<0.000000e+00> : vector<4xf32>
      %25 = vector.multi_reduction <add>, %24, %cst_22 [1] : vector<4x256xf32> to vector<4xf32>
      %26 = vector.shape_cast %25 : vector<4xf32> to vector<4x1xf32>
      %cst_23 = arith.constant 0.001953125 : f32
      %27 = vector.broadcast %cst_23 : f32 to vector<4x1xf32>
      %28 = arith.mulf %23, %27 : vector<4x1xf32>
      %cst_24 = arith.constant 0.001953125 : f32
      %29 = vector.broadcast %cst_24 : f32 to vector<4x1xf32>
      %30 = arith.mulf %26, %29 : vector<4x1xf32>
      %31 = arith.mulf %28, %28 : vector<4x1xf32>
      %32 = arith.subf %30, %31 : vector<4x1xf32>
      %cst_25 = arith.constant 0.000000e+00 : f32
      %33 = vector.broadcast %cst_25 : f32 to vector<4x1xf32>
      %34 = arith.maximumf %32, %33 : vector<4x1xf32>
      %cst_26 = arith.constant 9.99999974E-6 : f32
      %35 = vector.broadcast %cst_26 : f32 to vector<4x1xf32>
      %36 = arith.addf %34, %35 : vector<4x1xf32>
      %37 = math.rsqrt %36 : vector<4x1xf32>
      %c0_27 = arith.constant 0 : index
      %c0_28 = arith.constant 0 : index
      %38 = vector.load %arg5[%c0_27, %c0_28] : memref<4x1xf32, #tpu.memory_space<vmem>>, vector<4x1xf32>
      %39 = arith.mulf %37, %38 : vector<4x1xf32>
      %c0_29 = arith.constant 0 : index
      %c0_30 = arith.constant 0 : index
      %c0_31 = arith.constant 0 : index
      %40 = vector.load %arg7[%c0_29, %c0_30, %c0_31] : memref<1x4x1xf32, #tpu.memory_space<vmem>>, vector<1x4x1xf32>
      %41 = vector.shape_cast %40 : vector<1x4x1xf32> to vector<4x1xf32>
      %42 = vector.shape_cast %39 : vector<4x1xf32> to vector<1x4x1xf32>
      tpu.vector_store %arg7[%c0_29, %c0_30, %c0_31], %42 {strides = array<i32>} : memref<1x4x1xf32, #tpu.memory_space<vmem>>, vector<1x4x1xf32>,
      %c0_32 = arith.constant 0 : index
      %c0_33 = arith.constant 0 : index
      %43 = vector.load %arg6[%c0_32, %c0_33] : memref<4x1xf32, #tpu.memory_space<vmem>>, vector<4x1xf32>
      %44 = arith.mulf %28, %39 : vector<4x1xf32>
      %45 = arith.subf %43, %44 : vector<4x1xf32>
      %c0_34 = arith.constant 0 : index
      %c0_35 = arith.constant 0 : index
      %c0_36 = arith.constant 0 : index
      %46 = vector.load %arg8[%c0_34, %c0_35, %c0_36] : memref<1x4x1xf32, #tpu.memory_space<vmem>>, vector<1x4x1xf32>
      %47 = vector.shape_cast %46 : vector<1x4x1xf32> to vector<4x1xf32>
      %48 = vector.shape_cast %45 : vector<4x1xf32> to vector<1x4x1xf32>
      tpu.vector_store %arg8[%c0_34, %c0_35, %c0_36], %48 {strides = array<i32>} : memref<1x4x1xf32, #tpu.memory_space<vmem>>, vector<1x4x1xf32>,
    } else {
    }
    return
  }
  func.func @transform_0(%arg0: i32, %arg1: i32, %arg2: i32, %arg3: i32) -> (i32, i32, i32, i32) {
    %c0_i32 = arith.constant 0 : i32
    return %arg2, %arg0, %arg1, %arg3 : i32, i32, i32, i32
  }
  func.func @transform_1(%arg0: i32, %arg1: i32, %arg2: i32, %arg3: i32) -> (i32, i32) {
    %c0_i32 = arith.constant 0 : i32
    %c0_i32_0 = arith.constant 0 : i32
    return %arg1, %c0_i32 : i32, i32
  }
  func.func @transform_2(%arg0: i32, %arg1: i32, %arg2: i32, %arg3: i32) -> (i32, i32) {
    %c0_i32 = arith.constant 0 : i32
    %c0_i32_0 = arith.constant 0 : i32
    return %arg1, %c0_i32 : i32, i32
  }
  func.func @transform_3(%arg0: i32, %arg1: i32, %arg2: i32, %arg3: i32) -> (i32, i32, i32) {
    %c0_i32 = arith.constant 0 : i32
    %c0_i32_0 = arith.constant 0 : i32
    return %arg0, %arg1, %c0_i32 : i32, i32, i32
  }
  func.func @transform_4(%arg0: i32, %arg1: i32, %arg2: i32, %arg3: i32) -> (i32, i32, i32) {
    %c0_i32 = arith.constant 0 : i32
    %c0_i32_0 = arith.constant 0 : i32
    return %arg0, %arg1, %c0_i32 : i32, i32, i32
  }
}

</mosaic_0001>

<llo_original>
// kernel: tpu_custom_call.1
$region0: #{tpu_custom_call.1}
  #allocation0 [shape = 'u32[]', space=smem, size = 0x4, offset = 0x4, fixed_abs, tag = 'smem constant byte address 0x4 - core index']
  #allocation1 [shape = 'u32[144,128]{1,0:T(1,128)}', space=vmem, size = 0x12000, scoped, tag = 'internal scratch']
  #allocation2 [shape = 'f32[4,256]{1,0:T(4,128)}', space=vmem, size = 0x1000, scoped, tag = 'scratch operand']
  #allocation3 [shape = 'f32[4,256]{1,0:T(4,128)}', space=vmem, size = 0x1000, scoped, tag = 'scratch operand']
  %s0 = inlined_call_operand.hbm [shape: f32[2,4,4,256], index: 0, kind: input, shape index: {}]
  %s1 = inlined_call_operand.vmem [shape: f32[4,1], index: 1, kind: input, shape index: {}]
  %s2 = inlined_call_operand.vmem [shape: f32[4,1], index: 2, kind: input, shape index: {}]
  %s3 = inlined_call_operand.vmem [shape: f32[4,4,1], index: 3, kind: output, shape index: {0}]
  %s4 = inlined_call_operand.vmem [shape: f32[4,4,1], index: 4, kind: output, shape index: {1}]
  %5 = xla_tuple %s3, %s4
  %s6 = sld [smem:[#allocation0]]
  $region65: #{tpu_custom_call.1} parent=0
    _
  %s8 = ssub.s32 1, %s6
  %s9 = scalar_select 0, %s8, %s6
  $region1: #{tpu_custom_call.1} parent=0
    #allocation4 [shape = 'u8[16384]{0}', space=vmem, size = 0x4000, scoped, tag = 'input window, operand 0']
    #allocation5 [shape = 's32[2]{0}', space=sflag, size = 0x8, scoped, tag = 'scoped memory for tpu_custom_call.1']
    %10 = vsyncpa [#allocation5], 0
    %s11 = scalar_lea.sflag [#allocation5], 1
    %12 = vsyncpa %s11, 0
    loop: start=0, step=1, limit=6
    $region2: #{tpu_custom_call.1} parent=1 // loop_pre_header
      _
    $region3: #{tpu_custom_call.1} parent=1 // loop_header
      %s14 = sphi 0, %s18
      %p15 = scmp.ge.s32.totalorder %s14, 6
      %s21 = sphi 0, %s47
      %s22 = sphi 0, %s43
      %s23 = sphi 0, %s39
      %s24 = sphi 0, %s35
      %s25 = sphi 0, %s21
      %s26 = sphi 0, %s22
      %s27 = sphi 0, %s23
      %s28 = sphi 0, %s24
      %s29 = sphi 0, %s25
      %s30 = sphi 0, %s26
      %s31 = sphi 0, %s27
      %s32 = sphi 0, %s28
      %s56 = sphi 0, %s58
      %s59 = sphi 0, %s56
      %s60 = sphi 0, %s59
      %s76 = sphi 0, %s60
      %s82 = sphi 0, %s84
      %s85 = sphi 0, %s82
      %s86 = sphi 0, %s85
      %s102 = sphi 0, %s86
      %s108 = sphi 0, %s110
      %s111 = sphi 0, %s108
      %s112 = sphi 0, %s111
      %s128 = sphi 0, %s112
      %s136 = sphi 0, %s138
      %s139 = sphi 0, %s136
      %s140 = sphi 0, %s139
      %s156 = sphi 0, %s140
      %s164 = sphi 0, %s166
      %s167 = sphi 0, %s164
      %s168 = sphi 0, %s167
      %s184 = sphi 0, %s168
    $region4: #{tpu_custom_call.1} parent=1 // loop_header_branch
      %17 = sbr.rel (%p15) target = $region8
    $region5: #{tpu_custom_call.1} parent=1 // loop_body
      %s19 = ssub.s32 %s14, 1
      %s20 = ssub.s32 %s14, 2
      %s33 = sadd.s32 1, %s24
      %p34 = scmp.ge.s32.totalorder %s33, 1
      %s35 = scalar_select %p34, 0, %s33
      %s36 = sadd.s32 1, %s23
      %s37 = scalar_select %p34, %s36, %s23
      %p38 = scmp.ge.s32.totalorder %s37, 1
      %s39 = scalar_select %p38, 0, %s37
      %s40 = sadd.s32 1, %s22
      %s41 = scalar_select %p38, %s40, %s22
      %p42 = scmp.ge.s32.totalorder %s41, 1
      %s43 = scalar_select %p42, 0, %s41
      %s44 = sadd.s32 1, %s21
      %s45 = scalar_select %p42, %s44, %s21
      %p46 = scmp.ge.s32.totalorder %s45, 4
      %s47 = scalar_select %p46, 0, %s45
      %s48 = ssub.s32 %s23, %s39
      %s49 = ssub.s32 %s21, %s47
      %s50 = sor.u32 %s48, %s49
      %s51 = ssub.s32 %s22, %s43
      %s52 = sor.u32 %s50, %s51
      %s53 = ssub.s32 %s24, %s35
      %s54 = sor.u32 %s52, %s53
      %p55 = scmp.eq.s32.totalorder %s54, 0
      %s57 = sadd.s32 %s56, 1
      %s58 = scalar_select %p55, %s56, %s57
      %p61 = pneg %p55
      %p62 = scmp.eq.s32.totalorder %s14, 3
      %p63 = por %p61, %p62
      %p64 = scmp.ne.s32.totalorder %s56, %s59
      %p65 = scmp.eq.s32.totalorder %s14, 0
      %p66 = por %p64, %p65
      %p67 = scmp.ne.s32.totalorder %s56, %s59
      %p68 = scmp.eq.s32.totalorder %s19, 3
      %p69 = por %p67, %p68
      %p70 = scmp.ne.s32.totalorder %s59, %s60
      %p71 = scmp.eq.s32.totalorder %s19, 0
      %p72 = por %p70, %p71
      %p73 = scmp.ne.s32.totalorder %s59, %s60
      %p74 = scmp.eq.s32.totalorder %s20, 3
      %p75 = por %p73, %p74
      %p77 = scmp.ne.s32.totalorder %s60, %s76
      %p78 = scmp.eq.s32.totalorder %s20, 0
      %p79 = por %p77, %p78
      %s80 = ssub.s32 %s22, %s43
      %p81 = scmp.eq.s32.totalorder %s80, 0
      %s83 = sadd.s32 %s82, 1
      %s84 = scalar_select %p81, %s82, %s83
      %p87 = pneg %p81
      %p88 = scmp.eq.s32.totalorder %s14, 3
      %p89 = por %p87, %p88
      %p90 = scmp.ne.s32.totalorder %s82, %s85
      %p91 = scmp.eq.s32.totalorder %s14, 0
      %p92 = por %p90, %p91
      %p93 = scmp.ne.s32.totalorder %s82, %s85
      %p94 = scmp.eq.s32.totalorder %s19, 3
      %p95 = por %p93, %p94
      %p96 = scmp.ne.s32.totalorder %s85, %s86
      %p97 = scmp.eq.s32.totalorder %s19, 0
      %p98 = por %p96, %p97
      %p99 = scmp.ne.s32.totalorder %s85, %s86
      %p100 = scmp.eq.s32.totalorder %s20, 3
      %p101 = por %p99, %p100
      %p103 = scmp.ne.s32.totalorder %s86, %s102
      %p104 = scmp.eq.s32.totalorder %s20, 0
      %p105 = por %p103, %p104
      %s106 = ssub.s32 %s22, %s43
      %p107 = scmp.eq.s32.totalorder %s106, 0
      %s109 = sadd.s32 %s108, 1
      %s110 = scalar_select %p107, %s108, %s109
      %p113 = pneg %p107
      %p114 = scmp.eq.s32.totalorder %s14, 3
      %p115 = por %p113, %p114
      %p116 = scmp.ne.s32.totalorder %s108, %s111
      %p117 = scmp.eq.s32.totalorder %s14, 0
      %p118 = por %p116, %p117
      %p119 = scmp.ne.s32.totalorder %s108, %s111
      %p120 = scmp.eq.s32.totalorder %s19, 3
      %p121 = por %p119, %p120
      %p122 = scmp.ne.s32.totalorder %s111, %s112
      %p123 = scmp.eq.s32.totalorder %s19, 0
      %p124 = por %p122, %p123
      %p125 = scmp.ne.s32.totalorder %s111, %s112
      %p126 = scmp.eq.s32.totalorder %s20, 3
      %p127 = por %p125, %p126
      %p129 = scmp.ne.s32.totalorder %s112, %s128
      %p130 = scmp.eq.s32.totalorder %s20, 0
      %p131 = por %p129, %p130
      %s132 = ssub.s32 %s21, %s47
      %s133 = ssub.s32 %s22, %s43
      %s134 = sor.u32 %s132, %s133
      %p135 = scmp.eq.s32.totalorder %s134, 0
      %s137 = sadd.s32 %s136, 1
      %s138 = scalar_select %p135, %s136, %s137
      %p141 = pneg %p135
      %p142 = scmp.eq.s32.totalorder %s14, 3
      %p143 = por %p141, %p142
      %p144 = scmp.ne.s32.totalorder %s136, %s139
      %p145 = scmp.eq.s32.totalorder %s14, 0
      %p146 = por %p144, %p145
      %p147 = scmp.ne.s32.totalorder %s136, %s139
      %p148 = scmp.eq.s32.totalorder %s19, 3
      %p149 = por %p147, %p148
      %p150 = scmp.ne.s32.totalorder %s139, %s140
      %p151 = scmp.eq.s32.totalorder %s19, 0
      %p152 = por %p150, %p151
      %p153 = scmp.ne.s32.totalorder %s139, %s140
      %p154 = scmp.eq.s32.totalorder %s20, 3
      %p155 = por %p153, %p154
      %p157 = scmp.ne.s32.totalorder %s140, %s156
      %p158 = scmp.eq.s32.totalorder %s20, 0
      %p159 = por %p157, %p158
      %s160 = ssub.s32 %s21, %s47
      %s161 = ssub.s32 %s22, %s43
      %s162 = sor.u32 %s160, %s161
      %p163 = scmp.eq.s32.totalorder %s162, 0
      %s165 = sadd.s32 %s164, 1
      %s166 = scalar_select %p163, %s164, %s165
      %p169 = pneg %p163
      %p170 = scmp.eq.s32.totalorder %s14, 3
      %p171 = por %p169, %p170
      %p172 = scmp.ne.s32.totalorder %s164, %s167
      %p173 = scmp.eq.s32.totalorder %s14, 0
      %p174 = por %p172, %p173
      %p175 = scmp.ne.s32.totalorder %s164, %s167
      %p176 = scmp.eq.s32.totalorder %s19, 3
      %p177 = por %p175, %p176
      %p178 = scmp.ne.s32.totalorder %s167, %s168
      %p179 = scmp.eq.s32.totalorder %s19, 0
      %p180 = por %p178, %p179
      %p181 = scmp.ne.s32.totalorder %s167, %s168
      %p182 = scmp.eq.s32.totalorder %s20, 3
      %p183 = por %p181, %p182
      %p185 = scmp.ne.s32.totalorder %s168, %s184
      %p186 = scmp.eq.s32.totalorder %s20, 0
      %p187 = por %p185, %p186
      %p188 = scmp.le.s32.totalorder 1, %s14
      %p189 = scmp.lt.s32.totalorder %s14, 5
      %p190 = pnand %p188, %p189
      %p191 = pneg %p190
      // Predicated region
      $region9: #{tpu_custom_call.1} parent=5 // pred_check
        _
      $region10: #{tpu_custom_call.1} parent=5 // pred_check_branch
        %193 = sbr.rel (%p190) target = $region12
      $region11: #{tpu_custom_call.1} parent=5 // pred_region
        %s194 = ssub.s32 %s14, 1
        // Predicated region
        $region13: #{tpu_custom_call.1} parent=11 // pred_check
          %p195 = pneg %p98
        $region14: #{tpu_custom_call.1} parent=11 // pred_check_branch
          %197 = sbr.rel (%p195) target = $region16
        $region15: #{tpu_custom_call.1} parent=11 // pred_region
          %p198 = scmp.lt.s32.totalorder %s26, 0
          %s199 = scalar_select %p198, %s26, 0
          %s200 = smul.addr %s199, 4
          %s201 = scalar_lea.vmem %s1, %s200
        $region16: #{tpu_custom_call.1} parent=11 // pred_fallthru
          _
        // Predicated region
        $region17: #{tpu_custom_call.1} parent=11 // pred_check
          %p202 = pneg %p124
        $region18: #{tpu_custom_call.1} parent=11 // pred_check_branch
          %204 = sbr.rel (%p202) target = $region20
        $region19: #{tpu_custom_call.1} parent=11 // pred_region
          %p205 = scmp.lt.s32.totalorder %s26, 0
          %s206 = scalar_select %p205, %s26, 0
          %s207 = smul.addr %s206, 4
          %s208 = scalar_lea.vmem %s2, %s207
        $region20: #{tpu_custom_call.1} parent=11 // pred_fallthru
          _
      $region12: #{tpu_custom_call.1} parent=5 // pred_fallthru
        _
      %p209 = scmp.lt.s32.totalorder %s14, 4
      // Predicated region
      $region21: #{tpu_custom_call.1} parent=5 // pred_check
        %p210 = pneg %p209
      $region22: #{tpu_custom_call.1} parent=5 // pred_check_branch
        %212 = sbr.rel (%p210) target = $region24
      $region23: #{tpu_custom_call.1} parent=5 // pred_region
        // Predicated region
        $region25: #{tpu_custom_call.1} parent=23 // pred_check
          %p213 = pneg %p66
        $region26: #{tpu_custom_call.1} parent=23 // pred_check_branch
          %215 = sbr.rel (%p213) target = $region28
        $region27: #{tpu_custom_call.1} parent=23 // pred_region
          %s216 = sand.u32 %s56, 1
          %s217 = scalar_lea.sflag [#allocation5], %s216
          %s218 = sand.u32 %s56, 1
          %s219 = smul.addr %s218, 16
          %s220 = scalar_lea.vmem [#allocation4], %s219
          %s221 = smul.u32 2, %s23
          %s222 = smul.u32 2, %s24
          %s224 = ssub.s32 256, 256
          %225 = vsyncadd %s217, %s224
          %s226 = smul.addr %s22, 2
          %s227 = sadd.s32 %s222, %s226
          %s228 = smul.addr %s21, 2
          %s229 = sadd.s32 %s227, %s228
          %s230 = smul.addr %s221, 8
          %s231 = sadd.s32 %s229, %s230
          %s232 = smul.addr %s231, 64
          %s233 = scalar_lea.hbm %s0, %s232
          %s234 = sshll.u32 %s220, 4
          %s235 = int_to_ptr.vmem [resolvable:$true] %s234
          %240 = dma.hbm_to_vmem [thread:$0]  %s233, 256, %s235, %s217, 512, 128, 8
        $region28: #{tpu_custom_call.1} parent=23 // pred_fallthru
          _
      $region24: #{tpu_custom_call.1} parent=5 // pred_fallthru
        _
      %p241 = scmp.le.s32.totalorder 1, %s14
      %p242 = scmp.lt.s32.totalorder %s14, 5
      %p243 = pnand %p241, %p242
      %p244 = pneg %p243
      // Predicated region
      $region29: #{tpu_custom_call.1} parent=5 // pred_check
        _
      $region30: #{tpu_custom_call.1} parent=5 // pred_check_branch
        %246 = sbr.rel (%p243) target = $region32
      $region31: #{tpu_custom_call.1} parent=5 // pred_region
        %s247 = ssub.s32 %s14, 1
        %s248 = sand.u32 %s59, 1
        %s249 = scalar_lea.sflag [#allocation5], %s248
        %s250 = sand.u32 %s59, 1
        %s251 = smul.addr %s250, 16
        %s252 = scalar_lea.vmem [#allocation4], %s251
        // Predicated region
        $region33: #{tpu_custom_call.1} parent=31 // pred_check
          %p253 = pneg %p72
        $region34: #{tpu_custom_call.1} parent=31 // pred_check_branch
          %255 = sbr.rel (%p253) target = $region36
        $region35: #{tpu_custom_call.1} parent=31 // pred_region
          %256 = dma.done %s249, 256
        $region36: #{tpu_custom_call.1} parent=31 // pred_fallthru
          _
        %s257 = sand.u32 %s59, 1
        %s258 = scalar_lea.sflag [#allocation5], %s257
        %s259 = sand.u32 %s59, 1
        %s260 = smul.addr %s259, 16
        %s261 = scalar_lea.vmem [#allocation4], %s260
        %p262 = pneg %p72
        %p263 = pneg %p69
        %p264 = scmp.lt.s32.totalorder %s26, 0
        %s265 = scalar_select %p264, %s26, 0
        %s266 = smul.addr %s265, 4
        %s267 = scalar_lea.vmem %s1, %s266
        %p268 = pneg %p98
        %p269 = pneg %p95
        %p270 = scmp.lt.s32.totalorder %s26, 0
        %s271 = scalar_select %p270, %s26, 0
        %s272 = smul.addr %s271, 4
        %s273 = scalar_lea.vmem %s2, %s272
        %p274 = pneg %p124
        %p275 = pneg %p121
        %p276 = pneg %p152
        %p277 = pneg %p149
        %p278 = scmp.lt.s32.totalorder %s25, 3
        %s279 = scalar_select %p278, %s25, 3
        %p280 = scmp.lt.s32.totalorder %s26, 0
        %s281 = scalar_select %p280, %s26, 0
        %s282 = sadd.s32 %s281, %s279
        %s283 = smul.addr %s282, 4
        %s284 = scalar_lea.vmem %s3, %s283
        %p285 = pneg %p180
        %p286 = pneg %p177
        %p287 = scmp.lt.s32.totalorder %s25, 3
        %s288 = scalar_select %p287, %s25, 3
        %p289 = scmp.lt.s32.totalorder %s26, 0
        %s290 = scalar_select %p289, %s26, 0
        %s291 = sadd.s32 %s290, %s288
        %s292 = smul.addr %s291, 4
        %s293 = scalar_lea.vmem %s4, %s292
        %s294 = smul.u32 2, %s27
        %s295 = smul.u32 2, %s28
        %p296 = scmp.lt.s32.totalorder %s26, 0
        %s297 = scalar_select %p296, %s26, 0
        %s298 = smul.addr %s297, 4
        %s299 = scalar_lea.vmem %s1, %s298
        %p300 = scmp.lt.s32.totalorder %s26, 0
        %s301 = scalar_select %p300, %s26, 0
        %s302 = smul.addr %s301, 4
        %s303 = scalar_lea.vmem %s2, %s302
        %p304 = scmp.lt.s32.totalorder %s25, 3
        %s305 = scalar_select %p304, %s25, 3
        %p306 = scmp.lt.s32.totalorder %s26, 0
        %s307 = scalar_select %p306, %s26, 0
        %s308 = sadd.s32 %s307, %s305
        %s309 = smul.addr %s308, 4
        %s310 = scalar_lea.vmem %s3, %s309
        %p311 = scmp.lt.s32.totalorder %s25, 3
        %s312 = scalar_select %p311, %s25, 3
        %p313 = scmp.lt.s32.totalorder %s26, 0
        %s314 = scalar_select %p313, %s26, 0
        %s315 = sadd.s32 %s314, %s312
        %s316 = smul.addr %s315, 4
        %s317 = scalar_lea.vmem %s4, %s316
        %p318 = scmp.eq.s32.totalorder %s27, 0
        %p319 = scmp.eq.s32.totalorder %s28, 0
        %p320 = pnand %p318, %p319
        %p321 = pneg %p320
        // Predicated region
        $region37: #{tpu_custom_call.1} parent=31 // pred_check
          _
        $region38: #{tpu_custom_call.1} parent=31 // pred_check_branch
          %323 = sbr.rel (%p320) target = $region40
        $region39: #{tpu_custom_call.1} parent=31 // pred_region
          %324 = vst [vmem:[#allocation2] sm:$0xff] 0.0
          %325 = vst [vmem:[#allocation3] sm:$0xff] 0.0
        $region40: #{tpu_custom_call.1} parent=31 // pred_fallthru
          _
        %v326 = vld [vmem:[%s252] sm:$0xff]
        %v327 = vld [vmem:[%s252 + $0x8] sm:$0xff]
        %v328 = vld [vmem:[#allocation2] sm:$0xff]
        %v331 = vcombine.high %v326, %v326
        %v332 = vcombine.high %v327, %v327
        %vm335 = vcmask 1043456
        %v336 = vsel %vm335, %v326, 0.0
        %v337 = vsel %vm335, %v327, 0.0
        %v338 = vadd.f32 %v336, %v337
        %v339 = vsel %vm335, %v331, 0.0
        %v340 = vsel %vm335, %v332, 0.0
        %v341 = vadd.f32 %v339, %v340
        %v344 = vcombine.low %v338, %v341
        %v346 = vadd.f32 %v328, %v344
        %347 = vst [vmem:[#allocation2] sm:$0xff] %v346
        %v348 = vld [vmem:[#allocation3] sm:$0xff]
        %v349 = vmul.f32 %v326, %v326
        %v350 = vmul.f32 %v327, %v327
        %v353 = vcombine.high %v349, %v349
        %v354 = vcombine.high %v350, %v350
        %v357 = vsel %vm335, %v349, 0.0
        %v358 = vsel %vm335, %v350, 0.0
        %v359 = vadd.f32 %v357, %v358
        %v360 = vsel %vm335, %v353, 0.0
        %v361 = vsel %vm335, %v354, 0.0
        %v362 = vadd.f32 %v360, %v361
        %v365 = vcombine.low %v359, %v362
        %v367 = vadd.f32 %v348, %v365
        %368 = vst [vmem:[#allocation3] sm:$0xff] %v367
        // Predicated region
        $region41: #{tpu_custom_call.1} parent=31 // pred_check
          _
        $region42: #{tpu_custom_call.1} parent=31 // pred_check_branch
          %370 = sbr.rel (%p320) target = $region44
        $region43: #{tpu_custom_call.1} parent=31 // pred_region
          %v371 = vld [vmem:[#allocation2] sm:$0xff]
          %v373 = vcombine.high %v371, %v371
          %v375 = vsel %vm335, %v371, 0.0
          %v376 = vsel %vm335, %v373, 0.0
          %v377 = vadd.f32 %v375, %v376
          %378 = vadd.xlane.f32.xlu0 %v377
          %v379 = vpop.xlane.xlu0 %378
          %v380 = vld [vmem:[#allocation3] sm:$0xff]
          %v382 = vcombine.high %v380, %v380
          %v384 = vsel %vm335, %v380, 0.0
          %v385 = vsel %vm335, %v382, 0.0
          %v386 = vadd.f32 %v384, %v385
          %387 = vadd.xlane.f32.xlu0 %v386
          %v388 = vpop.xlane.xlu0 %387
          %v389 = vmul.f32 %v379, 0.001953125
          %v390 = vmul.f32 %v388, 0.001953125
          %v391 = vmul.f32 %v389, %v389
          %v392 = vsub.f32 %v390, %v391
          %v393 = vmax.f32 %v392, 0.0
          %v394 = vadd.f32 %v393, 1e-05
          %v395 = vrsqrt.pop %v394
          %v396 = vld [vmem:[%s299] sm:$0xf]
          %v397 = vmul.f32 %v395, %v396
          %vm398 = vcmask 3072
          %399 = vst.msk [vmem:[%s310] sm:$0xf] %vm398, %v397
          %v400 = vld [vmem:[%s303] sm:$0xf]
          %v401 = vmul.f32 %v389, %v397
          %v402 = vsub.f32 %v400, %v401
          %403 = vst.msk [vmem:[%s317] sm:$0xf] %vm398, %v402
        $region44: #{tpu_custom_call.1} parent=31 // pred_fallthru
          _
        %p404 = scmp.lt.s32.totalorder %s25, 3
        %s405 = scalar_select %p404, %s25, 3
        %p406 = scmp.lt.s32.totalorder %s26, 0
        %s407 = scalar_select %p406, %s26, 0
        %s408 = sadd.s32 %s407, %s405
        %s409 = smul.addr %s408, 4
        %s410 = scalar_lea.vmem %s3, %s409
        %p411 = scmp.lt.s32.totalorder %s25, 3
        %s412 = scalar_select %p411, %s25, 3
        %p413 = scmp.lt.s32.totalorder %s26, 0
        %s414 = scalar_select %p413, %s26, 0
        %s415 = sadd.s32 %s414, %s412
        %s416 = smul.addr %s415, 4
        %s417 = scalar_lea.vmem %s4, %s416
        // Predicated region
        $region45: #{tpu_custom_call.1} parent=31 // pred_check
          %p418 = pneg %p149
        $region46: #{tpu_custom_call.1} parent=31 // pred_check_branch
          %420 = sbr.rel (%p418) target = $region48
        $region47: #{tpu_custom_call.1} parent=31 // pred_region
          _
        $region48: #{tpu_custom_call.1} parent=31 // pred_fallthru
          _
        // Predicated region
        $region49: #{tpu_custom_call.1} parent=31 // pred_check
          %p421 = pneg %p177
        $region50: #{tpu_custom_call.1} parent=31 // pred_check_branch
          %423 = sbr.rel (%p421) target = $region52
        $region51: #{tpu_custom_call.1} parent=31 // pred_region
          _
        $region52: #{tpu_custom_call.1} parent=31 // pred_fallthru
          _
      $region32: #{tpu_custom_call.1} parent=5 // pred_fallthru
        _
      %p424 = scmp.le.s32.totalorder 2, %s14
      // Predicated region
      $region53: #{tpu_custom_call.1} parent=5 // pred_check
        %p425 = pneg %p424
      $region54: #{tpu_custom_call.1} parent=5 // pred_check_branch
        %427 = sbr.rel (%p425) target = $region56
      $region55: #{tpu_custom_call.1} parent=5 // pred_region
        %s428 = ssub.s32 %s14, 2
        // Predicated region
        $region57: #{tpu_custom_call.1} parent=55 // pred_check
          %p429 = pneg %p155
        $region58: #{tpu_custom_call.1} parent=55 // pred_check_branch
          %431 = sbr.rel (%p429) target = $region60
        $region59: #{tpu_custom_call.1} parent=55 // pred_region
          %p432 = scmp.lt.s32.totalorder %s29, 3
          %s433 = scalar_select %p432, %s29, 3
          %p434 = scmp.lt.s32.totalorder %s30, 0
          %s435 = scalar_select %p434, %s30, 0
          %s436 = sadd.s32 %s435, %s433
          %s437 = smul.addr %s436, 4
          %s438 = scalar_lea.vmem %s3, %s437
        $region60: #{tpu_custom_call.1} parent=55 // pred_fallthru
          _
        // Predicated region
        $region61: #{tpu_custom_call.1} parent=55 // pred_check
          %p439 = pneg %p183
        $region62: #{tpu_custom_call.1} parent=55 // pred_check_branch
          %441 = sbr.rel (%p439) target = $region64
        $region63: #{tpu_custom_call.1} parent=55 // pred_region
          %p442 = scmp.lt.s32.totalorder %s29, 3
          %s443 = scalar_select %p442, %s29, 3
          %p444 = scmp.lt.s32.totalorder %s30, 0
          %s445 = scalar_select %p444, %s30, 0
          %s446 = sadd.s32 %s445, %s443
          %s447 = smul.addr %s446, 4
          %s448 = scalar_lea.vmem %s4, %s447
        $region64: #{tpu_custom_call.1} parent=55 // pred_fallthru
          _
      $region56: #{tpu_custom_call.1} parent=5 // pred_fallthru
        _
    $region6: #{tpu_custom_call.1} parent=1 // loop_footer
      %s18 = sadd.s32 1, %s14
    $region7: #{tpu_custom_call.1} parent=1 // loop_footer_branch
      %13 = sbr.rel target = $region3
    $region8: #{tpu_custom_call.1} parent=1 // loop_exit
      _
    %449 = vsyncpa [#allocation5], 1
    %s450 = scalar_lea.sflag [#allocation5], 1
    %451 = vsyncpa %s450, 1

</llo_original>
